<compile_context>
chip_gen: v7x
topology: tpu7x:2x2x1
jax: 0.10.0
libtpu: 0.0.40
codegen_flags: <defaults>
</compile_context>

<pallas_src>
import jax
import jax.numpy as jnp
from jax.experimental import pallas as pl
from jax.experimental.pallas import tpu as pltpu


def _disc_cluster_kernel(c_ref, hpl_ref, hmi_ref, b1_ref, b2_ref, sc1_ref, sc2_ref):
    c_row = c_ref[...].astype(jnp.float32)     # (1, n_h) — broadcasts along sublanes
    h_pl = hpl_ref[...].astype(jnp.float32)    # (tile_nb, n_h)
    h_mi = hmi_ref[...].astype(jnp.float32)    # (tile_nb, n_h)
    # Row-wise dot (VPU multiply + XLU lane reduce) with fused bias add.
    sc1_ref[...] = jnp.sum(h_pl * c_row, axis=-1, keepdims=True) + b1_ref[...]
    sc2_ref[...] = jnp.sum(h_mi * c_row, axis=-1, keepdims=True) + b2_ref[...]


def _vmem_capacity_bytes():
    """Physical VMEM per TensorCore; conservative fallback if unqueryable."""
    try:
        info = pltpu.get_tpu_info()
        cap = getattr(info, "vmem_capacity_bytes", None)
        if cap:
            return int(cap)
    except Exception:
        pass
    return 64 * 1024 * 1024  # v7x per-TC size (most restrictive generation)


def _choose_tile_nb(n_nb, n_h, dtype, vmem_cap):
    """Byte-budgeted row tile.

    Targets ~8 MiB of lane-padded streamed input (2 arrays) per grid step,
    rounded to the dtype's sublane-packing multiple, and keeps >= 2 grid
    steps for large inputs so both v7x TensorCores get work.
    """
    itemsize = jnp.dtype(dtype).itemsize
    sub = max(8, (4 // max(itemsize, 1)) * 8)        # 8 f32, 16 bf16, 32 int8/fp8
    lanes = ((n_h + 127) // 128) * 128               # 128-lane VMEM padding
    per_row = 2 * lanes * itemsize                   # 2 streamed inputs, padded
    target = min(8 * 1024 * 1024, vmem_cap // 8)     # streamed bytes per grid step
    tile = max(sub, (target // per_row) // sub * sub)

    if tile >= n_nb:
        if n_nb >= 2 * sub:
            # Cap so grid_n >= 2 (megacore sharding on v7x); last block ragged.
            half = (n_nb + 1) // 2
            tile = ((half + sub - 1) // sub) * sub
        else:
            tile = n_nb                               # full extent: always legal
    return int(min(tile, n_nb))


def _prep_bias(bias, n_nb):
    if bias is None:
        return jnp.zeros((n_nb, 1), jnp.float32)
    b = jnp.asarray(bias, jnp.float32).reshape(-1)
    if b.shape[0] == 1:
        b = jnp.broadcast_to(b, (n_nb,))
    return b.reshape(n_nb, 1)


def discriminator_cluster(c, c2, h_0, h_pl, h_mi, S, s_bias1=None, s_bias2=None):
    """JAX/Pallas equivalent of Discriminator_cluster.forward.

    c2, h_0 and S are accepted for signature parity but (as in the PyTorch
    module) do not affect the computed logits.
    """
    del c2, h_0, S
    n_nb, n_h = h_pl.shape
    out_dtype = h_pl.dtype

    c_row = jnp.reshape(c, (1, n_h))
    b1 = _prep_bias(s_bias1, n_nb)
    b2 = _prep_bias(s_bias2, n_nb)

    vmem_cap = _vmem_capacity_bytes()
    tile_nb = _choose_tile_nb(n_nb, n_h, h_pl.dtype, vmem_cap)
    grid_n = pl.cdiv(n_nb, tile_nb)
    # Generation-aware scoped-VMEM limit: ~38 MiB on v7x (64 MiB TC), 48 MiB on
    # v5e/v6e (128 MiB) — always leaves headroom for compiler-internal scratch.
    vmem_limit = min(int(vmem_cap * 0.6), 48 * 1024 * 1024)

    sc1, sc2 = pl.pallas_call(
        _disc_cluster_kernel,
        out_shape=(
            jax.ShapeDtypeStruct((n_nb, 1), jnp.float32),
            jax.ShapeDtypeStruct((n_nb, 1), jnp.float32),
        ),
        grid=(grid_n,),
        in_specs=[
            pl.BlockSpec((1, n_h), lambda i: (0, 0)),        # summary vector c
            pl.BlockSpec((tile_nb, n_h), lambda i: (i, 0)),  # h_pl tile
            pl.BlockSpec((tile_nb, n_h), lambda i: (i, 0)),  # h_mi tile
            pl.BlockSpec((tile_nb, 1), lambda i: (i, 0)),    # fused bias 1
            pl.BlockSpec((tile_nb, 1), lambda i: (i, 0)),    # fused bias 2
        ],
        out_specs=(
            pl.BlockSpec((tile_nb, 1), lambda i: (i, 0)),
            pl.BlockSpec((tile_nb, 1), lambda i: (i, 0)),
        ),
        compiler_params=pltpu.CompilerParams(
            dimension_semantics=("parallel",),
            vmem_limit_bytes=vmem_limit,
        ),
    )(c_row, h_pl, h_mi, b1, b2)

    # torch: cat((sc_1, sc_2), 0).view(1, -1)
    logits = jnp.concatenate([sc1[:, 0], sc2[:, 0]], axis=0)[None, :]
    return logits.astype(out_dtype)


def _reference(c, h_pl, h_mi, s_bias1=None, s_bias2=None):
    c_x = jnp.broadcast_to(jnp.reshape(c, (1, -1)).astype(jnp.float32), h_pl.shape)
    sc_1 = jnp.sum(h_pl.astype(jnp.float32) * c_x, axis=-1)
    sc_2 = jnp.sum(h_mi.astype(jnp.float32) * c_x, axis=-1)
    if s_bias1 is not None:
        sc_1 = sc_1 + jnp.reshape(s_bias1, (-1,)).astype(jnp.float32)
    if s_bias2 is not None:
        sc_2 = sc_2 + jnp.reshape(s_bias2, (-1,)).astype(jnp.float32)
    return jnp.concatenate([sc_1, sc_2], axis=0)[None, :].astype(h_pl.dtype)


def _run_case(key, n_nb, n_h, num_clusters, with_bias):
    k_c, k_c2, k_h0, k_pl, k_mi, k_S, k_b1, k_b2 = jax.random.split(key, 8)
    c = jax.random.normal(k_c, (1, n_h), dtype=jnp.float32)
    c2 = jax.random.normal(k_c2, (num_clusters, n_h), dtype=jnp.float32)   # unused in fwd
    h_0 = jax.random.normal(k_h0, (n_nb, n_h), dtype=jnp.float32)
    h_pl = jax.random.normal(k_pl, (n_nb, n_h), dtype=jnp.float32)
    h_mi = jax.random.normal(k_mi, (n_nb, n_h), dtype=jnp.float32)
    S = jax.random.normal(k_S, (n_nb, num_clusters), dtype=jnp.float32)    # unused in fwd
    s_bias1 = jax.random.normal(k_b1, (n_nb,), dtype=jnp.float32) if with_bias else None
    s_bias2 = jax.random.normal(k_b2, (n_nb,), dtype=jnp.float32) if with_bias else None

    logits = discriminator_cluster(c, c2, h_0, h_pl, h_mi, S, s_bias1, s_bias2)
    logits = jax.block_until_ready(logits)
    ref = _reference(c, h_pl, h_mi, s_bias1, s_bias2)
    assert logits.shape == (1, 2 * n_nb), logits.shape
    assert jnp.allclose(logits, ref, atol=1e-5, rtol=1e-5)


if __name__ == "__main__":
    key = jax.random.PRNGKey(0)
    k1, k2, k3, k4 = jax.random.split(key, 4)

    # Small shape consistent with the module: n_nb nodes, n_h hidden dim.
    _run_case(k1, n_nb=8, n_h=32, num_clusters=4, with_bias=False)
    _run_case(k2, n_nb=8, n_h=32, num_clusters=4, with_bias=True)
    # Exercise multi-step grid + ragged last tile path.
    _run_case(k3, n_nb=300, n_h=96, num_clusters=4, with_bias=False)
    _run_case(k4, n_nb=300, n_h=96, num_clusters=4, with_bias=True)

    print("KERNEL_OK")
</pallas_src>

<mosaic_0001>
module attributes {stable_mosaic.version = 11 : i64} {
  func.func @_disc_cluster_kernel(%arg0: i32, %arg1: memref<1x32xf32, #tpu.memory_space<vmem>>, %arg2: memref<8x32xf32, #tpu.memory_space<vmem>>, %arg3: memref<8x32xf32, #tpu.memory_space<vmem>>, %arg4: memref<8x1xf32, #tpu.memory_space<vmem>>, %arg5: memref<8x1xf32, #tpu.memory_space<vmem>>, %arg6: memref<8x1xf32, #tpu.memory_space<vmem>>, %arg7: memref<8x1xf32, #tpu.memory_space<vmem>>) attributes {dimension_semantics = [#tpu.dimension_semantics<parallel>], iteration_bounds = array<i64: 1>, scalar_prefetch = 0 : i64, scratch_operands = 0 : i64, tpu.core_type = #tpu.core_type<tc>, window_params = [{pipeline_mode = #tpu.pipeline_mode<synchronous>, transform_indices = @transform_0, window_bounds = array<i64: 1, 32>}, {transform_indices = @transform_1, window_bounds = array<i64: 8, 32>}, {transform_indices = @transform_2, window_bounds = array<i64: 8, 32>}, {transform_indices = @transform_3, window_bounds = array<i64: 8, 1>}, {transform_indices = @transform_4, window_bounds = array<i64: 8, 1>}, {transform_indices = @transform_5, window_bounds = array<i64: 8, 1>}, {transform_indices = @transform_6, window_bounds = array<i64: 8, 1>}]} {
    %c0 = arith.constant 0 : index
    %c0_0 = arith.constant 0 : index
    %0 = vector.load %arg1[%c0, %c0_0] : memref<1x32xf32, #tpu.memory_space<vmem>>, vector<1x32xf32>
    %c0_1 = arith.constant 0 : index
    %c0_2 = arith.constant 0 : index
    %1 = vector.load %arg2[%c0_1, %c0_2] : memref<8x32xf32, #tpu.memory_space<vmem>>, vector<8x32xf32>
    %c0_3 = arith.constant 0 : index
    %c0_4 = arith.constant 0 : index
    %2 = vector.load %arg3[%c0_3, %c0_4] : memref<8x32xf32, #tpu.memory_space<vmem>>, vector<8x32xf32>
    %3 = vector.broadcast %0 : vector<1x32xf32> to vector<8x32xf32>
    %4 = arith.mulf %1, %3 : vector<8x32xf32>
    %cst = arith.constant dense<0.000000e+00> : vector<8xf32>
    %5 = vector.multi_reduction <add>, %4, %cst [1] : vector<8x32xf32> to vector<8xf32>
    %6 = vector.shape_cast %5 : vector<8xf32> to vector<8x1xf32>
    %c0_5 = arith.constant 0 : index
    %c0_6 = arith.constant 0 : index
    %7 = vector.load %arg4[%c0_5, %c0_6] : memref<8x1xf32, #tpu.memory_space<vmem>>, vector<8x1xf32>
    %8 = arith.addf %6, %7 : vector<8x1xf32>
    %c0_7 = arith.constant 0 : index
    %c0_8 = arith.constant 0 : index
    %9 = vector.load %arg6[%c0_7, %c0_8] : memref<8x1xf32, #tpu.memory_space<vmem>>, vector<8x1xf32>
    tpu.vector_store %arg6[%c0_7, %c0_8], %8 {strides = array<i32>} : memref<8x1xf32, #tpu.memory_space<vmem>>, vector<8x1xf32>,
    %10 = vector.broadcast %0 : vector<1x32xf32> to vector<8x32xf32>
    %11 = arith.mulf %2, %10 : vector<8x32xf32>
    %cst_9 = arith.constant dense<0.000000e+00> : vector<8xf32>
    %12 = vector.multi_reduction <add>, %11, %cst_9 [1] : vector<8x32xf32> to vector<8xf32>
    %13 = vector.shape_cast %12 : vector<8xf32> to vector<8x1xf32>
    %c0_10 = arith.constant 0 : index
    %c0_11 = arith.constant 0 : index
    %14 = vector.load %arg5[%c0_10, %c0_11] : memref<8x1xf32, #tpu.memory_space<vmem>>, vector<8x1xf32>
    %15 = arith.addf %13, %14 : vector<8x1xf32>
    %c0_12 = arith.constant 0 : index
    %c0_13 = arith.constant 0 : index
    %16 = vector.load %arg7[%c0_12, %c0_13] : memref<8x1xf32, #tpu.memory_space<vmem>>, vector<8x1xf32>
    tpu.vector_store %arg7[%c0_12, %c0_13], %15 {strides = array<i32>} : memref<8x1xf32, #tpu.memory_space<vmem>>, vector<8x1xf32>,
    return
  }
  func.func @transform_0(%arg0: i32) -> (i32, i32) {
    %c0_i32 = arith.constant 0 : i32
    %c0_i32_0 = arith.constant 0 : i32
    %c0_i32_1 = arith.constant 0 : i32
    return %c0_i32, %c0_i32_0 : i32, i32
  }
  func.func @transform_1(%arg0: i32) -> (i32, i32) {
    %c0_i32 = arith.constant 0 : i32
    %c0_i32_0 = arith.constant 0 : i32
    return %arg0, %c0_i32 : i32, i32
  }
  func.func @transform_2(%arg0: i32) -> (i32, i32) {
    %c0_i32 = arith.constant 0 : i32
    %c0_i32_0 = arith.constant 0 : i32
    return %arg0, %c0_i32 : i32, i32
  }
  func.func @transform_3(%arg0: i32) -> (i32, i32) {
    %c0_i32 = arith.constant 0 : i32
    %c0_i32_0 = arith.constant 0 : i32
    return %arg0, %c0_i32 : i32, i32
  }
  func.func @transform_4(%arg0: i32) -> (i32, i32) {
    %c0_i32 = arith.constant 0 : i32
    %c0_i32_0 = arith.constant 0 : i32
    return %arg0, %c0_i32 : i32, i32
  }
  func.func @transform_5(%arg0: i32) -> (i32, i32) {
    %c0_i32 = arith.constant 0 : i32
    %c0_i32_0 = arith.constant 0 : i32
    return %arg0, %c0_i32 : i32, i32
  }
  func.func @transform_6(%arg0: i32) -> (i32, i32) {
    %c0_i32 = arith.constant 0 : i32
    %c0_i32_0 = arith.constant 0 : i32
    return %arg0, %c0_i32 : i32, i32
  }
}

</mosaic_0001>

<llo_original>
// kernel: tpu_custom_call.1
$region0: #{tpu_custom_call.1}
  #allocation0 [shape = 'u32[]', space=smem, size = 0x4, offset = 0x4, fixed_abs, tag = 'smem constant byte address 0x4 - core index']
  #allocation1 [shape = 'u32[144,128]{1,0:T(1,128)}', space=vmem, size = 0x12000, scoped, tag = 'internal scratch']
  %s0 = inlined_call_operand.vmem [shape: f32[1,32], index: 0, kind: input, shape index: {}]
  %s1 = inlined_call_operand.vmem [shape: f32[8,32], index: 1, kind: input, shape index: {}]
  %s2 = inlined_call_operand.vmem [shape: f32[8,32], index: 2, kind: input, shape index: {}]
  %s3 = inlined_call_operand.vmem [shape: f32[8,1], index: 3, kind: input, shape index: {}]
  %s4 = inlined_call_operand.vmem [shape: f32[8,1], index: 4, kind: input, shape index: {}]
  %s5 = inlined_call_operand.vmem [shape: f32[8,1], index: 5, kind: output, shape index: {0}]
  %s6 = inlined_call_operand.vmem [shape: f32[8,1], index: 6, kind: output, shape index: {1}]
  %7 = xla_tuple %s5, %s6
  %s8 = sld [smem:[#allocation0]]
  $region38: #{tpu_custom_call.1} parent=0
    _
  %s10 = ssub.s32 1, %s8
  %s11 = scalar_select 0, %s10, %s8
  // Predicated region
  $region2: #{tpu_custom_call.1} parent=0 // pred_check
    _
  $region3: #{tpu_custom_call.1} parent=0 // pred_check_branch
    %13 = sbr.rel (0) target = $region5
  $region4: #{tpu_custom_call.1} parent=0 // pred_region
    _
  $region5: #{tpu_custom_call.1} parent=0 // pred_fallthru
    _
  // Predicated region
  $region6: #{tpu_custom_call.1} parent=0 // pred_check
    _
  $region7: #{tpu_custom_call.1} parent=0 // pred_check_branch
    %15 = sbr.rel (0) target = $region9
  $region8: #{tpu_custom_call.1} parent=0 // pred_region
    _
  $region9: #{tpu_custom_call.1} parent=0 // pred_fallthru
    _
  // Predicated region
  $region10: #{tpu_custom_call.1} parent=0 // pred_check
    _
  $region11: #{tpu_custom_call.1} parent=0 // pred_check_branch
    %17 = sbr.rel (0) target = $region13
  $region12: #{tpu_custom_call.1} parent=0 // pred_region
    _
  $region13: #{tpu_custom_call.1} parent=0 // pred_fallthru
    _
  // Predicated region
  $region14: #{tpu_custom_call.1} parent=0 // pred_check
    _
  $region15: #{tpu_custom_call.1} parent=0 // pred_check_branch
    %19 = sbr.rel (0) target = $region17
  $region16: #{tpu_custom_call.1} parent=0 // pred_region
    _
  $region17: #{tpu_custom_call.1} parent=0 // pred_fallthru
    _
  // Predicated region
  $region18: #{tpu_custom_call.1} parent=0 // pred_check
    _
  $region19: #{tpu_custom_call.1} parent=0 // pred_check_branch
    %21 = sbr.rel (0) target = $region21
  $region20: #{tpu_custom_call.1} parent=0 // pred_region
    _
  $region21: #{tpu_custom_call.1} parent=0 // pred_fallthru
    _
  %v22 = vld [vmem:[%s0] sm:$0x1]
  %v23 = vld [vmem:[%s1] sm:$0xff]
  %v24 = vld [vmem:[%s2] sm:$0xff]
  %v26 = vlaneseq
  %v27 = vshrl.u32 %v26, 7
  %v28 = vsub.s32 0, %v27
  %v29 = vrot.slane %v22, %v28
  %v31 = vmul.f32 %v23, %v29
  %vm32 = vcmask 261120
  %v33 = vsel %vm32, %v31, 0.0
  %34 = vadd.xlane.f32.xlu0 %v33
  %v35 = vpop.xlane.xlu0 %34
  %v36 = vld [vmem:[%s3] sm:$0xff]
  %v37 = vadd.f32 %v35, %v36
  %vm38 = vcmask 7168
  %39 = vst.msk [vmem:[%s5] sm:$0xff] %vm38, %v37
  %v40 = vmul.f32 %v24, %v29
  %v41 = vsel %vm32, %v40, 0.0
  %42 = vadd.xlane.f32.xlu0 %v41
  %v43 = vpop.xlane.xlu0 %42
  %v44 = vld [vmem:[%s4] sm:$0xff]
  %v45 = vadd.f32 %v43, %v44
  %46 = vst.msk [vmem:[%s6] sm:$0xff] %vm38, %v45
  // Predicated region
  $region22: #{tpu_custom_call.1} parent=0 // pred_check
    _
  $region23: #{tpu_custom_call.1} parent=0 // pred_check_branch
    %48 = sbr.rel (0) target = $region25
  $region24: #{tpu_custom_call.1} parent=0 // pred_region
    _
  $region25: #{tpu_custom_call.1} parent=0 // pred_fallthru
    _
  // Predicated region
  $region26: #{tpu_custom_call.1} parent=0 // pred_check
    _
  $region27: #{tpu_custom_call.1} parent=0 // pred_check_branch
    %50 = sbr.rel (0) target = $region29
  $region28: #{tpu_custom_call.1} parent=0 // pred_region
    _
  $region29: #{tpu_custom_call.1} parent=0 // pred_fallthru
    _
  // Predicated region
  $region30: #{tpu_custom_call.1} parent=0 // pred_check
    _
  $region31: #{tpu_custom_call.1} parent=0 // pred_check_branch
    %52 = sbr.rel (0) target = $region33
  $region32: #{tpu_custom_call.1} parent=0 // pred_region
    _
  $region33: #{tpu_custom_call.1} parent=0 // pred_fallthru
    _
  // Predicated region
  $region34: #{tpu_custom_call.1} parent=0 // pred_check
    _
  $region35: #{tpu_custom_call.1} parent=0 // pred_check_branch
    %54 = sbr.rel (0) target = $region37
  $region36: #{tpu_custom_call.1} parent=0 // pred_region
    _
  $region37: #{tpu_custom_call.1} parent=0 // pred_fallthru
    _

</llo_original>
